<compile_context>
chip_gen: v7x
topology: tpu7x:2x2x1
jax: 0.10.0
libtpu: 0.0.40
codegen_flags: <defaults>
</compile_context>

<pallas_src>
import functools

import jax
import jax.numpy as jnp
import numpy as np
from jax import lax
from jax.experimental import pallas as pl
from jax.experimental.pallas import tpu as pltpu

# ----------------------------- configuration -------------------------------
T_IN = 16          # input sequence length (time frames)
BATCH = 2
N_MELS = 16
NHIDDEN_RNN = 32
NLAYERS_RNN = 2
CELL_TYPE = "LSTM"
VOCAB_SIZE = 29
BN_EPS = 1e-5

LANE = 128


def _round_up(x, m):
    return (x + m - 1) // m * m


# ============================ Pallas kernels ================================
def fused_matmul_kernel(x_ref, w_ref, b_ref, o_ref, *, clamp_lo, clamp_hi):
    """out = clamp(x @ w + b)   (BN already folded into w, b in glue)."""
    y = jnp.dot(x_ref[...], w_ref[...], preferred_element_type=jnp.float32)
    y = y + b_ref[...]
    if clamp_lo is not None:
        y = jnp.clip(y, clamp_lo, clamp_hi)
    o_ref[...] = y


def pallas_matmul(x, w, b, clamp=None, block_m=256):
    """clamp(x @ w + b) with bf16 MXU operands and f32 accumulation.

    N and K are zero-padded to multiples of 128 (lane-dense stores, aligned
    loads); M is tiled over a "parallel" grid axis.  Padding is stripped from
    the returned array.
    """
    M, K = x.shape
    N = w.shape[1]
    Kp = _round_up(K, LANE)
    Np = _round_up(N, LANE)
    if M <= block_m:
        bm, Mp = M, M
    else:
        bm = block_m
        Mp = _round_up(M, bm)

    xp = jnp.pad(x.astype(jnp.bfloat16), ((0, Mp - M), (0, Kp - K)))
    wp = jnp.pad(w.astype(jnp.bfloat16), ((0, Kp - K), (0, Np - N)))
    bp = jnp.pad(b.astype(jnp.float32), (0, Np - N)).reshape(1, Np)

    kernel = functools.partial(
        fused_matmul_kernel,
        clamp_lo=None if clamp is None else clamp[0],
        clamp_hi=None if clamp is None else clamp[1])

    out = pl.pallas_call(
        kernel,
        out_shape=jax.ShapeDtypeStruct((Mp, Np), jnp.float32),
        grid_spec=pltpu.PrefetchScalarGridSpec(
            num_scalar_prefetch=0,
            grid=(Mp // bm,),
            in_specs=[pl.BlockSpec((bm, Kp), lambda i: (i, 0)),
                      pl.BlockSpec((Kp, Np), lambda i: (0, 0)),
                      pl.BlockSpec((1, Np), lambda i: (0, 0))],
            out_specs=pl.BlockSpec((bm, Np), lambda i: (i, 0)),
        ),
        compiler_params=pltpu.CompilerParams(
            dimension_semantics=("parallel",)),
    )(xp, wp, bp)
    return out[:M, :N]


def bilstm_layer_kernel(x_ref, wih_ref, b_ref, whh_ref, out_ref, xp_scr,
                        *, seq_len, batch):
    """One full bidirectional LSTM layer (input proj + recurrence, both dirs).

    Column layout of gates / xproj / whh is gate-major, direction-minor:
        [i_f i_b | f_f f_b | g_f g_b | o_f o_b]   (each block H wide, 8H total)
    h / c layout: (batch, 2H) with fwd in [:, :H] and bwd in [:, H:].
    The bwd direction scans reversed time; the wrapper un-reverses it.
    """
    G = wih_ref.shape[1]          # 8H
    H2 = whh_ref.shape[0]         # 2H
    H = H2 // 2

    # Input projection for every timestep and both directions: one MXU matmul.
    xp_scr[...] = jnp.dot(x_ref[...], wih_ref[...],
                          preferred_element_type=jnp.float32) + b_ref[...]
    whh = whh_ref[...]            # (2H, 8H) block-diagonal recurrent weight

    lane = lax.broadcasted_iota(jnp.int32, (batch, G), 1)
    is_fwd = (lane % H2) < H      # fwd half of every gate block

    def step(t, carry):
        h, c = carry
        xf = xp_scr[pl.ds(t * batch, batch), :]                    # time t (fwd)
        xb = xp_scr[pl.ds((seq_len - 1 - t) * batch, batch), :]    # time T-1-t (bwd)
        gates = jnp.where(is_fwd, xf, xb) + jnp.dot(
            h.astype(jnp.bfloat16), whh, preferred_element_type=jnp.float32)
        sig = jax.nn.sigmoid(gates)                 # one full-width EUP pass
        i = sig[:, 0 * H2:1 * H2]
        f = sig[:, 1 * H2:2 * H2]
        g = jnp.tanh(gates[:, 2 * H2:3 * H2])
        o = sig[:, 3 * H2:4 * H2]
        c = f * c + i * g
        h = o * jnp.tanh(c)
        out_ref[pl.ds(t * batch, batch), :] = h
        return h, c

    zeros = jnp.zeros((batch, H2), jnp.float32)
    lax.fori_loop(0, seq_len, step, (zeros, zeros), unroll=True)


def pallas_bilstm_layer(x_seq, wih_cat, b_cat, whh_blk):
    """x_seq: (T, B, Din) -> (T, B, 2H) with PyTorch bi-LSTM output semantics."""
    T, B, Din = x_seq.shape
    H2, G = whh_blk.shape
    kernel = functools.partial(bilstm_layer_kernel, seq_len=T, batch=B)
    hs = pl.pallas_call(
        kernel,
        out_shape=jax.ShapeDtypeStruct((T * B, H2), jnp.float32),
        scratch_shapes=[pltpu.VMEM((T * B, G), jnp.float32)],
    )(x_seq.reshape(T * B, Din).astype(jnp.bfloat16),
      wih_cat.astype(jnp.bfloat16),
      b_cat.reshape(1, G).astype(jnp.float32),
      whh_blk.astype(jnp.bfloat16))
    hs = hs.reshape(T, B, H2)
    H = H2 // 2
    # bwd half was produced on reversed time: flip it back, concat fwd|bwd.
    return jnp.concatenate([hs[:, :, :H], hs[::-1, :, H:]], axis=-1)


# ================================ JAX glue ==================================
def extract_patches(x_nchw, kh, kw, sh, sw, ph, pw):
    """(B,C,H,W) -> ((B*Ho*Wo, C*kh*kw), Ho, Wo).

    Feature order is (C, kh, kw), matching PyTorch Conv2d weight.reshape(O, -1).
    """
    # TODO(synk): for production-length sequences, stream patch tiles into the
    # matmul kernel instead of materializing the full patch matrix in HBM.
    B, C, _, _ = x_nchw.shape
    patches = lax.conv_general_dilated_patches(
        x_nchw, filter_shape=(kh, kw), window_strides=(sh, sw),
        padding=((ph, ph), (pw, pw)),
        dimension_numbers=("NCHW", "OIHW", "NCHW"))      # (B, C*kh*kw, Ho, Wo)
    Ho, Wo = patches.shape[2], patches.shape[3]
    patches = patches.transpose(0, 2, 3, 1).reshape(B * Ho * Wo, C * kh * kw)
    return patches, Ho, Wo


def bn_fold(gamma, beta, mean, var, eps=BN_EPS):
    inv = gamma / jnp.sqrt(var + eps)
    return inv, beta - mean * inv


def prep_bilstm_params(p, layer, H):
    """Pack one layer's fwd+bwd LSTM params into the fused-kernel layout."""
    Wih_f, Whh_f = p[f"lstm_l{layer}_fwd_Wih"], p[f"lstm_l{layer}_fwd_Whh"]
    Wih_b, Whh_b = p[f"lstm_l{layer}_bwd_Wih"], p[f"lstm_l{layer}_bwd_Whh"]
    bias_f = p[f"lstm_l{layer}_fwd_bih"] + p[f"lstm_l{layer}_fwd_bhh"]
    bias_b = p[f"lstm_l{layer}_bwd_bih"] + p[f"lstm_l{layer}_bwd_bhh"]
    Din = Wih_f.shape[1]

    # (Din, 8H) input weights, gate-major / direction-minor column order.
    wih_cat = jnp.stack([Wih_f.reshape(4, H, Din),
                         Wih_b.reshape(4, H, Din)], axis=1)   # (4, 2, H, Din)
    wih_cat = wih_cat.reshape(8 * H, Din).T
    b_cat = jnp.stack([bias_f.reshape(4, H),
                       bias_b.reshape(4, H)], axis=1).reshape(8 * H)

    # Block-diagonal recurrent weight (2H, 8H): rows [:H]=h_fwd, [H:]=h_bwd.
    Wf = Whh_f.reshape(4, H, H)   # (gate, h_out, h_in)
    Wb = Whh_b.reshape(4, H, H)
    blk = jnp.zeros((2 * H, 8 * H), jnp.float32)
    for k in range(4):
        blk = blk.at[:H, (2 * k) * H:(2 * k + 1) * H].set(Wf[k].T)
        blk = blk.at[H:, (2 * k + 1) * H:(2 * k + 2) * H].set(Wb[k].T)
    return wih_cat, b_cat, blk


def init_params(key):
    keys = iter(jax.random.split(key, 64))
    p = {}
    s = 0.1
    # CNN
    p["conv1_w"] = s * jax.random.normal(next(keys), (32, 1, 41, 11), jnp.float32)
    p["conv1_b"] = s * jax.random.normal(next(keys), (32,), jnp.float32)
    p["conv2_w"] = s * jax.random.normal(next(keys), (32, 32, 21, 11), jnp.float32)
    p["conv2_b"] = s * jax.random.normal(next(keys), (32,), jnp.float32)
    for i in (1, 2):
        p[f"bn{i}_gamma"] = 1.0 + s * jax.random.normal(next(keys), (32,), jnp.float32)
        p[f"bn{i}_beta"] = s * jax.random.normal(next(keys), (32,), jnp.float32)
        p[f"bn{i}_mean"] = s * jax.random.normal(next(keys), (32,), jnp.float32)
        p[f"bn{i}_var"] = 1.0 + 0.1 * jax.nn.softplus(
            jax.random.normal(next(keys), (32,), jnp.float32))
    # LSTM (bidirectional, NLAYERS_RNN layers); biases follow reset_parameters():
    # b_ih forget gate = 1, rest 0 ; b_hh = 0.
    H = NHIDDEN_RNN
    bih = jnp.concatenate([jnp.zeros((H,)), jnp.ones((H,)),
                           jnp.zeros((H,)), jnp.zeros((H,))]).astype(jnp.float32)
    bhh = jnp.zeros((4 * H,), jnp.float32)
    in_size0 = 32 * (N_MELS // 2)
    for layer in range(NLAYERS_RNN):
        in_size = in_size0 if layer == 0 else 2 * H
        for d in ("fwd", "bwd"):
            p[f"lstm_l{layer}_{d}_Wih"] = s * jax.random.normal(
                next(keys), (4 * H, in_size), jnp.float32)
            p[f"lstm_l{layer}_{d}_Whh"] = s * jax.random.normal(
                next(keys), (4 * H, H), jnp.float32)
            p[f"lstm_l{layer}_{d}_bih"] = bih
            p[f"lstm_l{layer}_{d}_bhh"] = bhh
    # char linear
    p["lin_w"] = s * jax.random.normal(next(keys), (VOCAB_SIZE, 2 * H), jnp.float32)
    p["lin_b"] = s * jax.random.normal(next(keys), (VOCAB_SIZE,), jnp.float32)
    return p


def ctc_forward_pallas(x, lens, p):
    """x: (T, B, n_mels).  Returns (out_lin (To, B, vocab), lens_out)."""
    T, B, n_mels = x.shape
    H = NHIDDEN_RNN
    # (T,B,M) -> transpose(0,1) -> unsqueeze(1): (B, 1, T, M) NCHW, bf16 for MXU
    x_nchw = jnp.transpose(x, (1, 0, 2))[:, None, :, :].astype(jnp.bfloat16)

    # --- conv block 1: Conv2d(1->32,(41,11),s=2,p=(20,5)) + BN + Hardtanh ---
    sc1, sh1 = bn_fold(p["bn1_gamma"], p["bn1_beta"], p["bn1_mean"], p["bn1_var"])
    w1 = p["conv1_w"].reshape(32, -1).T * sc1[None, :]
    b1 = p["conv1_b"] * sc1 + sh1
    patches, Ho, Wo = extract_patches(x_nchw, 41, 11, 2, 2, 20, 5)
    y = pallas_matmul(patches, w1, b1, clamp=(0.0, 20.0))          # (B*Ho*Wo, 32)
    y = y.reshape(B, Ho, Wo, 32).transpose(0, 3, 1, 2)             # (B,32,Ho,Wo)

    # --- conv block 2: Conv2d(32->32,(21,11),s=(2,1),p=(10,5)) + BN + Hardtanh ---
    sc2, sh2 = bn_fold(p["bn2_gamma"], p["bn2_beta"], p["bn2_mean"], p["bn2_var"])
    w2 = p["conv2_w"].reshape(32, -1).T * sc2[None, :]
    b2 = p["conv2_b"] * sc2 + sh2
    patches, Ho2, Wo2 = extract_patches(y.astype(jnp.bfloat16), 21, 11, 2, 1, 10, 5)
    y = pallas_matmul(patches, w2, b2, clamp=(0.0, 20.0))          # (B*To*Wc, 32)
    y = y.reshape(B, Ho2, Wo2, 32)

    # permute(2,0,1,3).reshape(To,B,-1): features ordered (C, W) as in PyTorch
    h_seq = y.transpose(1, 0, 3, 2).reshape(Ho2, B, 32 * Wo2)      # (To, B, 256)

    # --- bidirectional multi-layer LSTM: one fused pallas_call per layer ---
    for layer in range(NLAYERS_RNN):
        wih_cat, b_cat, whh_blk = prep_bilstm_params(p, layer, H)
        h_seq = pallas_bilstm_layer(h_seq, wih_cat, b_cat, whh_blk)  # (To,B,2H)

    # --- char linear ---
    To = h_seq.shape[0]
    out = pallas_matmul(h_seq.reshape(To * B, 2 * H), p["lin_w"].T, p["lin_b"])
    out = out.reshape(To, B, VOCAB_SIZE)
    # The PyTorch module itself packs the RNN input with lengths = lens // 4.
    return out, lens // 4


# ----------------------- pure-JAX f32 reference (for checking) -------------
def ctc_forward_ref(x, lens, p):
    T, B, n_mels = x.shape
    H = NHIDDEN_RNN
    xin = jnp.transpose(x, (1, 0, 2))[:, None, :, :]

    def conv_bn_htanh(x_nchw, w, b, g, bt, m, v, stride, pad):
        y = jax.lax.conv_general_dilated(
            x_nchw, w, window_strides=stride, padding=[pad[0], pad[1]],
            dimension_numbers=("NCHW", "OIHW", "NCHW"))
        y = y + b[None, :, None, None]
        y = (y - m[None, :, None, None]) / jnp.sqrt(v[None, :, None, None] + BN_EPS)
        y = y * g[None, :, None, None] + bt[None, :, None, None]
        return jnp.clip(y, 0.0, 20.0)

    y = conv_bn_htanh(xin, p["conv1_w"], p["conv1_b"], p["bn1_gamma"],
                      p["bn1_beta"], p["bn1_mean"], p["bn1_var"],
                      (2, 2), ((20, 20), (5, 5)))
    y = conv_bn_htanh(y, p["conv2_w"], p["conv2_b"], p["bn2_gamma"],
                      p["bn2_beta"], p["bn2_mean"], p["bn2_var"],
                      (2, 1), ((10, 10), (5, 5)))
    To = y.shape[2]
    rnn_in = jnp.transpose(y, (2, 0, 1, 3)).reshape(To, B, -1)

    def lstm_dir(xseq, Wih, Whh, bih, bhh):
        def step(carry, xt):
            h, c = carry
            gates = xt @ Wih.T + bih + h @ Whh.T + bhh
            i, f, g, o = jnp.split(gates, 4, axis=-1)
            i, f, o = jax.nn.sigmoid(i), jax.nn.sigmoid(f), jax.nn.sigmoid(o)
            g = jnp.tanh(g)
            c = f * c + i * g
            h = o * jnp.tanh(c)
            return (h, c), h
        h0 = jnp.zeros((B, H), jnp.float32)
        c0 = jnp.zeros((B, H), jnp.float32)
        _, hs = jax.lax.scan(step, (h0, c0), xseq)
        return hs

    h_seq = rnn_in
    for layer in range(NLAYERS_RNN):
        f = lstm_dir(h_seq, p[f"lstm_l{layer}_fwd_Wih"], p[f"lstm_l{layer}_fwd_Whh"],
                     p[f"lstm_l{layer}_fwd_bih"], p[f"lstm_l{layer}_fwd_bhh"])
        b = lstm_dir(h_seq[::-1], p[f"lstm_l{layer}_bwd_Wih"], p[f"lstm_l{layer}_bwd_Whh"],
                     p[f"lstm_l{layer}_bwd_bih"], p[f"lstm_l{layer}_bwd_bhh"])[::-1]
        h_seq = jnp.concatenate([f, b], axis=-1)

    out = h_seq @ p["lin_w"].T + p["lin_b"]
    return out, lens // 4


# ================================= main =====================================
if __name__ == "__main__":
    key = jax.random.PRNGKey(0)
    k_param, k_data = jax.random.split(key)
    params = init_params(k_param)

    # input "PackedSequence" (dense, equal lengths): (T, B, n_mels)
    x = jax.random.normal(k_data, (T_IN, BATCH, N_MELS), jnp.float32)
    lens = jnp.full((BATCH,), T_IN, jnp.int32)

    out, lens_out = ctc_forward_pallas(x, lens, params)
    out = jax.block_until_ready(out)

    ref_out, ref_lens = ctc_forward_ref(x, lens, params)
    # Pallas path uses bf16 MXU operands (standard TPU inference numerics);
    # reference is pure f32, hence percent-level tolerance.
    np.testing.assert_allclose(np.asarray(out), np.asarray(ref_out),
                               rtol=5e-2, atol=5e-2)
    assert out.shape == (T_IN // 4, BATCH, VOCAB_SIZE)
    assert np.array_equal(np.asarray(lens_out), np.asarray(ref_lens))

    # TODO(synk): greedy_decode / beam_decode are host-side Python beam searches
    # over the log-softmax outputs; not a TPU-kernel target, left unimplemented.
    print("KERNEL_OK")
</pallas_src>

<mosaic_0001>
module attributes {stable_mosaic.version = 11 : i64} {
  func.func @fused_matmul_kernel(%arg0: i32, %arg1: memref<128x512xbf16, #tpu.memory_space<vmem>>, %arg2: memref<512x128xbf16, #tpu.memory_space<vmem>>, %arg3: memref<1x128xf32, #tpu.memory_space<vmem>>, %arg4: memref<128x128xf32, #tpu.memory_space<vmem>>) attributes {dimension_semantics = [#tpu.dimension_semantics<parallel>], iteration_bounds = array<i64: 1>, scalar_prefetch = 0 : i64, scratch_operands = 0 : i64, tpu.core_type = #tpu.core_type<tc>, window_params = [{transform_indices = @transform_0, window_bounds = array<i64: 128, 512>}, {pipeline_mode = #tpu.pipeline_mode<synchronous>, transform_indices = @transform_1, window_bounds = array<i64: 512, 128>}, {pipeline_mode = #tpu.pipeline_mode<synchronous>, transform_indices = @transform_2, window_bounds = array<i64: 1, 128>}, {transform_indices = @transform_3, window_bounds = array<i64: 128, 128>}]} {
    %c0 = arith.constant 0 : index
    %c0_0 = arith.constant 0 : index
    %0 = vector.load %arg1[%c0, %c0_0] : memref<128x512xbf16, #tpu.memory_space<vmem>>, vector<128x512xbf16>
    %c0_1 = arith.constant 0 : index
    %c0_2 = arith.constant 0 : index
    %1 = vector.load %arg2[%c0_1, %c0_2] : memref<512x128xbf16, #tpu.memory_space<vmem>>, vector<512x128xbf16>
    %cst = arith.constant dense<0.000000e+00> : vector<128x128xf32>
    %2 = tpu.matmul %0, %1, %cst {dimension_numbers = #tpu.dot_dimension_numbers<[1], [0], [0], [1], [0, 0, 1, 1], [], []>} : vector<128x512xbf16>, vector<512x128xbf16>, vector<128x128xf32> -> vector<128x128xf32>
    %c0_3 = arith.constant 0 : index
    %c0_4 = arith.constant 0 : index
    %3 = vector.load %arg3[%c0_3, %c0_4] : memref<1x128xf32, #tpu.memory_space<vmem>>, vector<1x128xf32>
    %4 = vector.broadcast %3 : vector<1x128xf32> to vector<128x128xf32>
    %5 = arith.addf %2, %4 : vector<128x128xf32>
    %cst_5 = arith.constant 0.000000e+00 : f32
    %cst_6 = arith.constant 2.000000e+01 : f32
    %6 = vector.broadcast %cst_5 : f32 to vector<128x128xf32>
    %7 = arith.maximumf %6, %5 : vector<128x128xf32>
    %8 = vector.broadcast %cst_6 : f32 to vector<128x128xf32>
    %9 = arith.minimumf %8, %7 : vector<128x128xf32>
    %c0_7 = arith.constant 0 : index
    %c0_8 = arith.constant 0 : index
    %10 = vector.load %arg4[%c0_7, %c0_8] : memref<128x128xf32, #tpu.memory_space<vmem>>, vector<128x128xf32>
    tpu.vector_store %arg4[%c0_7, %c0_8], %9 {strides = array<i32>} : memref<128x128xf32, #tpu.memory_space<vmem>>, vector<128x128xf32>,
    return
  }
  func.func @transform_0(%arg0: i32) -> (i32, i32) {
    %c0_i32 = arith.constant 0 : i32
    %c0_i32_0 = arith.constant 0 : i32
    return %arg0, %c0_i32 : i32, i32
  }
  func.func @transform_1(%arg0: i32) -> (i32, i32) {
    %c0_i32 = arith.constant 0 : i32
    %c0_i32_0 = arith.constant 0 : i32
    %c0_i32_1 = arith.constant 0 : i32
    return %c0_i32, %c0_i32_0 : i32, i32
  }
  func.func @transform_2(%arg0: i32) -> (i32, i32) {
    %c0_i32 = arith.constant 0 : i32
    %c0_i32_0 = arith.constant 0 : i32
    %c0_i32_1 = arith.constant 0 : i32
    return %c0_i32, %c0_i32_0 : i32, i32
  }
  func.func @transform_3(%arg0: i32) -> (i32, i32) {
    %c0_i32 = arith.constant 0 : i32
    %c0_i32_0 = arith.constant 0 : i32
    return %arg0, %c0_i32 : i32, i32
  }
}

</mosaic_0001>

<llo_original>
// kernel: tpu_custom_call.1
$region0: #{tpu_custom_call.1}
  #allocation0 [shape = 'u32[]', space=smem, size = 0x4, offset = 0x4, fixed_abs, tag = 'smem constant byte address 0x4 - core index']
  #allocation1 [shape = 'u32[144,128]{1,0:T(1,128)}', space=vmem, size = 0x12000, scoped, tag = 'internal scratch']
  %s0 = inlined_call_operand.hbm [shape: bf16[128,512], index: 0, kind: input, shape index: {}]
  %s1 = inlined_call_operand.hbm [shape: bf16[512,128], index: 1, kind: input, shape index: {}]
  %s2 = inlined_call_operand.vmem [shape: f32[1,128], index: 2, kind: input, shape index: {}]
  %s3 = inlined_call_operand.hbm [shape: f32[128,128], index: 3, kind: output, shape index: {}]
  %s4 = sld [smem:[#allocation0]]
  $region30: #{tpu_custom_call.1} parent=0
    _
  %s6 = ssub.s32 1, %s4
  %s7 = scalar_select 0, %s6, %s4
  $region1: #{tpu_custom_call.1} parent=0
    #allocation2 [shape = 'u8[131072]{0}', space=vmem, size = 0x20000, scoped, tag = 'input window, operand 0, single buffered']
    #allocation3 [shape = 's32[1]{0}', space=sflag, size = 0x4, scoped, tag = 'scoped memory for tpu_custom_call.1']
    #allocation4 [shape = 's32[1]{0}', space=sflag, size = 0x4, scoped, tag = 'scoped memory for tpu_custom_call.1']
    #allocation5 [shape = 'u8[131072]{0}', space=vmem, size = 0x20000, scoped, tag = 'input window, operand 1, single buffered']
    #allocation6 [shape = 's32[1]{0}', space=sflag, size = 0x4, scoped, tag = 'scoped memory for tpu_custom_call.1']
    #allocation7 [shape = 'u8[65536]{0}', space=vmem, size = 0x10000, scoped, tag = 'output window, operand 0, single buffered']
    %8 = vsyncpa [#allocation3], 0
    %9 = vsyncpa [#allocation6], 0
    %10 = vsyncpa [#allocation4], 0
    // Predicated region
    $region2: #{tpu_custom_call.1} parent=1 // pred_check
      _
    $region3: #{tpu_custom_call.1} parent=1 // pred_check_branch
      %12 = sbr.rel (0) target = $region5
    $region4: #{tpu_custom_call.1} parent=1 // pred_region
      %s14 = ssub.s32 4096, 4096
      %15 = vsyncadd [#allocation3], %s14
      %s16 = sshll.u32 [#allocation2], 4
      %s17 = int_to_ptr.vmem [resolvable:$true] %s16
      %22 = dma.hbm_to_vmem [thread:$0]  %s0, 4096, %s17, [#allocation3], 256, 256, 16
    $region5: #{tpu_custom_call.1} parent=1 // pred_fallthru
      _
    // Predicated region
    $region6: #{tpu_custom_call.1} parent=1 // pred_check
      _
    $region7: #{tpu_custom_call.1} parent=1 // pred_check_branch
      %24 = sbr.rel (0) target = $region9
    $region8: #{tpu_custom_call.1} parent=1 // pred_region
      %s26 = ssub.s32 4096, 4096
      %27 = vsyncadd [#allocation6], %s26
      %s28 = sshll.u32 [#allocation5], 4
      %s29 = int_to_ptr.vmem [resolvable:$true] %s28
      %34 = dma.hbm_to_vmem [thread:$0]  %s1, 4096, %s29, [#allocation6], 64, 64, 4
    $region9: #{tpu_custom_call.1} parent=1 // pred_fallthru
      _
    // Predicated region
    $region10: #{tpu_custom_call.1} parent=1 // pred_check
      _
    $region11: #{tpu_custom_call.1} parent=1 // pred_check_branch
      %36 = sbr.rel (0) target = $region13
    $region12: #{tpu_custom_call.1} parent=1 // pred_region
      _
    $region13: #{tpu_custom_call.1} parent=1 // pred_fallthru
      _
    // Predicated region
    $region14: #{tpu_custom_call.1} parent=1 // pred_check
      _
    $region15: #{tpu_custom_call.1} parent=1 // pred_check_branch
      %38 = sbr.rel (0) target = $region17
    $region16: #{tpu_custom_call.1} parent=1 // pred_region
      %39 = dma.done [#allocation3], 4096
    $region17: #{tpu_custom_call.1} parent=1 // pred_fallthru
      _
    // Predicated region
    $region18: #{tpu_custom_call.1} parent=1 // pred_check
      _
    $region19: #{tpu_custom_call.1} parent=1 // pred_check_branch
      %41 = sbr.rel (0) target = $region21
    $region20: #{tpu_custom_call.1} parent=1 // pred_region
      %42 = dma.done [#allocation6], 4096
    $region21: #{tpu_custom_call.1} parent=1 // pred_fallthru
      _
    %v44 = vld [vmem:[#allocation2] sm:$0xff]
    %v45 = vld [vmem:[#allocation2 + $0x8] sm:$0xff]
    %v46 = vld [vmem:[#allocation2 + $0x10] sm:$0xff]
    %v47 = vld [vmem:[#allocation2 + $0x18] sm:$0xff]
    %v48 = vld [vmem:[#allocation2 + $0x20] sm:$0xff]
    %v49 = vld [vmem:[#allocation2 + $0x28] sm:$0xff]
    %v50 = vld [vmem:[#allocation2 + $0x30] sm:$0xff]
    %v51 = vld [vmem:[#allocation2 + $0x38] sm:$0xff]
    %v52 = vld [vmem:[#allocation2 + $0x40] sm:$0xff]
    %v53 = vld [vmem:[#allocation2 + $0x48] sm:$0xff]
    %v54 = vld [vmem:[#allocation2 + $0x50] sm:$0xff]
    %v55 = vld [vmem:[#allocation2 + $0x58] sm:$0xff]
    %v56 = vld [vmem:[#allocation2 + $0x60] sm:$0xff]
    %v57 = vld [vmem:[#allocation2 + $0x68] sm:$0xff]
    %v58 = vld [vmem:[#allocation2 + $0x70] sm:$0xff]
    %v59 = vld [vmem:[#allocation2 + $0x78] sm:$0xff]
    %v60 = vld [vmem:[#allocation2 + $0x80] sm:$0xff]
    %v61 = vld [vmem:[#allocation2 + $0x88] sm:$0xff]
    %v62 = vld [vmem:[#allocation2 + $0x90] sm:$0xff]
    %v63 = vld [vmem:[#allocation2 + $0x98] sm:$0xff]
    %v64 = vld [vmem:[#allocation2 + $0xa0] sm:$0xff]
    %v65 = vld [vmem:[#allocation2 + $0xa8] sm:$0xff]
    %v66 = vld [vmem:[#allocation2 + $0xb0] sm:$0xff]
    %v67 = vld [vmem:[#allocation2 + $0xb8] sm:$0xff]
    %v68 = vld [vmem:[#allocation2 + $0xc0] sm:$0xff]
    %v69 = vld [vmem:[#allocation2 + $0xc8] sm:$0xff]
    %v70 = vld [vmem:[#allocation2 + $0xd0] sm:$0xff]
    %v71 = vld [vmem:[#allocation2 + $0xd8] sm:$0xff]
    %v72 = vld [vmem:[#allocation2 + $0xe0] sm:$0xff]
    %v73 = vld [vmem:[#allocation2 + $0xe8] sm:$0xff]
    %v74 = vld [vmem:[#allocation2 + $0xf0] sm:$0xff]
    %v75 = vld [vmem:[#allocation2 + $0xf8] sm:$0xff]
    %v76 = vld [vmem:[#allocation5] sm:$0xf]
    %v77 = vld [vmem:[#allocation5 + $0x4] sm:$0xf]
    %v78 = vld [vmem:[#allocation5 + $0x8] sm:$0xf]
    %v79 = vld [vmem:[#allocation5 + $0xc] sm:$0xf]
    %v80 = vld [vmem:[#allocation5 + $0x10] sm:$0xf]
    %v81 = vld [vmem:[#allocation5 + $0x14] sm:$0xf]
    %v82 = vld [vmem:[#allocation5 + $0x18] sm:$0xf]
    %v83 = vld [vmem:[#allocation5 + $0x1c] sm:$0xf]
    %v84 = vld [vmem:[#allocation5 + $0x20] sm:$0xf]
    %v85 = vld [vmem:[#allocation5 + $0x24] sm:$0xf]
    %v86 = vld [vmem:[#allocation5 + $0x28] sm:$0xf]
    %v87 = vld [vmem:[#allocation5 + $0x2c] sm:$0xf]
    %v88 = vld [vmem:[#allocation5 + $0x30] sm:$0xf]
    %v89 = vld [vmem:[#allocation5 + $0x34] sm:$0xf]
    %v90 = vld [vmem:[#allocation5 + $0x38] sm:$0xf]
    %v91 = vld [vmem:[#allocation5 + $0x3c] sm:$0xf]
    %v92 = vld [vmem:[#allocation5 + $0x40] sm:$0xf]
    %v93 = vld [vmem:[#allocation5 + $0x44] sm:$0xf]
    %v94 = vld [vmem:[#allocation5 + $0x48] sm:$0xf]
    %v95 = vld [vmem:[#allocation5 + $0x4c] sm:$0xf]
    %v96 = vld [vmem:[#allocation5 + $0x50] sm:$0xf]
    %v97 = vld [vmem:[#allocation5 + $0x54] sm:$0xf]
    %v98 = vld [vmem:[#allocation5 + $0x58] sm:$0xf]
    %v99 = vld [vmem:[#allocation5 + $0x5c] sm:$0xf]
    %v100 = vld [vmem:[#allocation5 + $0x60] sm:$0xf]
    %v101 = vld [vmem:[#allocation5 + $0x64] sm:$0xf]
    %v102 = vld [vmem:[#allocation5 + $0x68] sm:$0xf]
    %v103 = vld [vmem:[#allocation5 + $0x6c] sm:$0xf]
    %v104 = vld [vmem:[#allocation5 + $0x70] sm:$0xf]
    %v105 = vld [vmem:[#allocation5 + $0x74] sm:$0xf]
    %v106 = vld [vmem:[#allocation5 + $0x78] sm:$0xf]
    %v107 = vld [vmem:[#allocation5 + $0x7c] sm:$0xf]
    %v108 = vld [vmem:[#allocation5 + $0x80] sm:$0xf]
    %v109 = vld [vmem:[#allocation5 + $0x84] sm:$0xf]
    %v110 = vld [vmem:[#allocation5 + $0x88] sm:$0xf]
    %v111 = vld [vmem:[#allocation5 + $0x8c] sm:$0xf]
    %v112 = vld [vmem:[#allocation5 + $0x90] sm:$0xf]
    %v113 = vld [vmem:[#allocation5 + $0x94] sm:$0xf]
    %v114 = vld [vmem:[#allocation5 + $0x98] sm:$0xf]
    %v115 = vld [vmem:[#allocation5 + $0x9c] sm:$0xf]
    %v116 = vld [vmem:[#allocation5 + $0xa0] sm:$0xf]
    %v117 = vld [vmem:[#allocation5 + $0xa4] sm:$0xf]
    %v118 = vld [vmem:[#allocation5 + $0xa8] sm:$0xf]
    %v119 = vld [vmem:[#allocation5 + $0xac] sm:$0xf]
    %v120 = vld [vmem:[#allocation5 + $0xb0] sm:$0xf]
    %v121 = vld [vmem:[#allocation5 + $0xb4] sm:$0xf]
    %v122 = vld [vmem:[#allocation5 + $0xb8] sm:$0xf]
    %v123 = vld [vmem:[#allocation5 + $0xbc] sm:$0xf]
    %v124 = vld [vmem:[#allocation5 + $0xc0] sm:$0xf]
    %v125 = vld [vmem:[#allocation5 + $0xc4] sm:$0xf]
    %v126 = vld [vmem:[#allocation5 + $0xc8] sm:$0xf]
    %v127 = vld [vmem:[#allocation5 + $0xcc] sm:$0xf]
    %v128 = vld [vmem:[#allocation5 + $0xd0] sm:$0xf]
    %v129 = vld [vmem:[#allocation5 + $0xd4] sm:$0xf]
    %v130 = vld [vmem:[#allocation5 + $0xd8] sm:$0xf]
    %v131 = vld [vmem:[#allocation5 + $0xdc] sm:$0xf]
    %v132 = vld [vmem:[#allocation5 + $0xe0] sm:$0xf]
    %v133 = vld [vmem:[#allocation5 + $0xe4] sm:$0xf]
    %v134 = vld [vmem:[#allocation5 + $0xe8] sm:$0xf]
    %v135 = vld [vmem:[#allocation5 + $0xec] sm:$0xf]
    %v136 = vld [vmem:[#allocation5 + $0xf0] sm:$0xf]
    %v137 = vld [vmem:[#allocation5 + $0xf4] sm:$0xf]
    %v138 = vld [vmem:[#allocation5 + $0xf8] sm:$0xf]
    %v139 = vld [vmem:[#allocation5 + $0xfc] sm:$0xf]
    %v140 = vld [vmem:[%s2] sm:$0x1]
    %v142 = vlaneseq
    %v143 = vshrl.u32 %v142, 7
    %v144 = vsub.s32 0, %v143
    %v145 = vrot.slane %v140, %v144
    %v179 = vunpack.c.l.b16 %v44
    %v180 = vunpack.c.h.b16 %v44
    %v181 = vunpack.c.l.b16 %v45
    %v182 = vunpack.c.h.b16 %v45
    %v183 = vunpack.c.l.b16 %v46
    %v184 = vunpack.c.h.b16 %v46
    %v185 = vunpack.c.l.b16 %v47
    %v186 = vunpack.c.h.b16 %v47
    %v187 = vunpack.c.l.b16 %v48
    %v188 = vunpack.c.h.b16 %v48
    %v189 = vunpack.c.l.b16 %v49
    %v190 = vunpack.c.h.b16 %v49
    %v191 = vunpack.c.l.b16 %v50
    %v192 = vunpack.c.h.b16 %v50
    %v193 = vunpack.c.l.b16 %v51
    %v194 = vunpack.c.h.b16 %v51
    %v195 = vunpack.c.l.b16 %v52
    %v196 = vunpack.c.h.b16 %v52
    %v197 = vunpack.c.l.b16 %v53
    %v198 = vunpack.c.h.b16 %v53
    %v199 = vunpack.c.l.b16 %v54
    %v200 = vunpack.c.h.b16 %v54
    %v201 = vunpack.c.l.b16 %v55
    %v202 = vunpack.c.h.b16 %v55
    %v203 = vunpack.c.l.b16 %v56
    %v204 = vunpack.c.h.b16 %v56
    %v205 = vunpack.c.l.b16 %v57
    %v206 = vunpack.c.h.b16 %v57
    %v207 = vunpack.c.l.b16 %v58
    %v208 = vunpack.c.h.b16 %v58
    %v209 = vunpack.c.l.b16 %v59
    %v210 = vunpack.c.h.b16 %v59
    %v211 = vunpack.c.l.b16 %v60
    %v212 = vunpack.c.h.b16 %v60
    %v213 = vunpack.c.l.b16 %v61
    %v214 = vunpack.c.h.b16 %v61
    %v215 = vunpack.c.l.b16 %v62
    %v216 = vunpack.c.h.b16 %v62
    %v217 = vunpack.c.l.b16 %v63
    %v218 = vunpack.c.h.b16 %v63
    %v219 = vunpack.c.l.b16 %v64
    %v220 = vunpack.c.h.b16 %v64
    %v221 = vunpack.c.l.b16 %v65
    %v222 = vunpack.c.h.b16 %v65
    %v223 = vunpack.c.l.b16 %v66
    %v224 = vunpack.c.h.b16 %v66
    %v225 = vunpack.c.l.b16 %v67
    %v226 = vunpack.c.h.b16 %v67
    %v227 = vunpack.c.l.b16 %v68
    %v228 = vunpack.c.h.b16 %v68
    %v229 = vunpack.c.l.b16 %v69
    %v230 = vunpack.c.h.b16 %v69
    %v231 = vunpack.c.l.b16 %v70
    %v232 = vunpack.c.h.b16 %v70
    %v233 = vunpack.c.l.b16 %v71
    %v234 = vunpack.c.h.b16 %v71
    %v235 = vunpack.c.l.b16 %v72
    %v236 = vunpack.c.h.b16 %v72
    %v237 = vunpack.c.l.b16 %v73
    %v238 = vunpack.c.h.b16 %v73
    %v239 = vunpack.c.l.b16 %v74
    %v240 = vunpack.c.h.b16 %v74
    %v241 = vunpack.c.l.b16 %v75
    %v242 = vunpack.c.h.b16 %v75
    %v243 = vpack.c.b16 %v183, %v179
    %v244 = vpack.c.b16 %v184, %v180
    %v245 = vpack.c.b16 %v185, %v181
    %v246 = vpack.c.b16 %v186, %v182
    %v247 = vpack.c.b16 %v191, %v187
    %v248 = vpack.c.b16 %v192, %v188
    %v249 = vpack.c.b16 %v193, %v189
    %v250 = vpack.c.b16 %v194, %v190
    %v251 = vpack.c.b16 %v199, %v195
    %v252 = vpack.c.b16 %v200, %v196
    %v253 = vpack.c.b16 %v201, %v197
    %v254 = vpack.c.b16 %v202, %v198
    %v255 = vpack.c.b16 %v207, %v203
    %v256 = vpack.c.b16 %v208, %v204
    %v257 = vpack.c.b16 %v209, %v205
    %v258 = vpack.c.b16 %v210, %v206
    %v259 = vpack.c.b16 %v215, %v211
    %v260 = vpack.c.b16 %v216, %v212
    %v261 = vpack.c.b16 %v217, %v213
    %v262 = vpack.c.b16 %v218, %v214
    %v263 = vpack.c.b16 %v223, %v219
    %v264 = vpack.c.b16 %v224, %v220
    %v265 = vpack.c.b16 %v225, %v221
    %v266 = vpack.c.b16 %v226, %v222
    %v267 = vpack.c.b16 %v231, %v227
    %v268 = vpack.c.b16 %v232, %v228
    %v269 = vpack.c.b16 %v233, %v229
    %v270 = vpack.c.b16 %v234, %v230
    %v271 = vpack.c.b16 %v239, %v235
    %v272 = vpack.c.b16 %v240, %v236
    %v273 = vpack.c.b16 %v241, %v237
    %v274 = vpack.c.b16 %v242, %v238
    %v371 = vunpack.c.l.b16 %v76
    %v372 = vunpack.c.l.b16 %v77
    %v373 = vunpack.c.l.b16 %v78
    %v374 = vunpack.c.l.b16 %v79
    %v375 = vunpack.c.l.b16 %v80
    %v376 = vunpack.c.l.b16 %v81
    %v377 = vunpack.c.l.b16 %v82
    %v378 = vunpack.c.l.b16 %v83
    %v379 = vunpack.c.l.b16 %v84
    %v380 = vunpack.c.l.b16 %v85
    %v381 = vunpack.c.l.b16 %v86
    %v382 = vunpack.c.l.b16 %v87
    %v383 = vunpack.c.l.b16 %v88
    %v384 = vunpack.c.l.b16 %v89
    %v385 = vunpack.c.l.b16 %v90
    %v386 = vunpack.c.l.b16 %v91
    %v387 = vunpack.c.l.b16 %v92
    %v388 = vunpack.c.l.b16 %v93
    %v389 = vunpack.c.l.b16 %v94
    %v390 = vunpack.c.l.b16 %v95
    %v391 = vunpack.c.l.b16 %v96
    %v392 = vunpack.c.l.b16 %v97
    %v393 = vunpack.c.l.b16 %v98
    %v394 = vunpack.c.l.b16 %v99
    %v395 = vunpack.c.l.b16 %v100
    %v396 = vunpack.c.l.b16 %v101
    %v397 = vunpack.c.l.b16 %v102
    %v398 = vunpack.c.l.b16 %v103
    %v399 = vunpack.c.l.b16 %v104
    %v400 = vunpack.c.l.b16 %v105
    %v401 = vunpack.c.l.b16 %v106
    %v402 = vunpack.c.l.b16 %v107
    %v403 = vunpack.c.l.b16 %v108
    %v404 = vunpack.c.l.b16 %v109
    %v405 = vunpack.c.l.b16 %v110
    %v406 = vunpack.c.l.b16 %v111
    %v407 = vunpack.c.l.b16 %v112
    %v408 = vunpack.c.l.b16 %v113
    %v409 = vunpack.c.l.b16 %v114
    %v410 = vunpack.c.l.b16 %v115
    %v411 = vunpack.c.l.b16 %v116
    %v412 = vunpack.c.l.b16 %v117
    %v413 = vunpack.c.l.b16 %v118
    %v414 = vunpack.c.l.b16 %v119
    %v415 = vunpack.c.l.b16 %v120
    %v416 = vunpack.c.l.b16 %v121
    %v417 = vunpack.c.l.b16 %v122
    %v418 = vunpack.c.l.b16 %v123
    %v419 = vunpack.c.l.b16 %v124
    %v420 = vunpack.c.l.b16 %v125
    %v421 = vunpack.c.l.b16 %v126
    %v422 = vunpack.c.l.b16 %v127
    %v423 = vunpack.c.l.b16 %v128
    %v424 = vunpack.c.l.b16 %v129
    %v425 = vunpack.c.l.b16 %v130
    %v426 = vunpack.c.l.b16 %v131
    %v427 = vunpack.c.l.b16 %v132
    %v428 = vunpack.c.l.b16 %v133
    %v429 = vunpack.c.l.b16 %v134
    %v430 = vunpack.c.l.b16 %v135
    %v431 = vunpack.c.l.b16 %v136
    %v432 = vunpack.c.l.b16 %v137
    %v433 = vunpack.c.l.b16 %v138
    %v434 = vunpack.c.l.b16 %v139
    %v435 = vpack.c.b16 %v372, %v371
    %v436 = vpack.c.b16 %v374, %v373
    %v437 = vpack.c.b16 %v376, %v375
    %v438 = vpack.c.b16 %v378, %v377
    %v439 = vpack.c.b16 %v380, %v379
    %v440 = vpack.c.b16 %v382, %v381
    %v441 = vpack.c.b16 %v384, %v383
    %v442 = vpack.c.b16 %v386, %v385
    %v443 = vpack.c.b16 %v388, %v387
    %v444 = vpack.c.b16 %v390, %v389
    %v445 = vpack.c.b16 %v392, %v391
    %v446 = vpack.c.b16 %v394, %v393
    %v447 = vpack.c.b16 %v396, %v395
    %v448 = vpack.c.b16 %v398, %v397
    %v449 = vpack.c.b16 %v400, %v399
    %v450 = vpack.c.b16 %v402, %v401
    %v451 = vpack.c.b16 %v404, %v403
    %v452 = vpack.c.b16 %v406, %v405
    %v453 = vpack.c.b16 %v408, %v407
    %v454 = vpack.c.b16 %v410, %v409
    %v455 = vpack.c.b16 %v412, %v411
    %v456 = vpack.c.b16 %v414, %v413
    %v457 = vpack.c.b16 %v416, %v415
    %v458 = vpack.c.b16 %v418, %v417
    %v459 = vpack.c.b16 %v420, %v419
    %v460 = vpack.c.b16 %v422, %v421
    %v461 = vpack.c.b16 %v424, %v423
    %v462 = vpack.c.b16 %v426, %v425
    %v463 = vpack.c.b16 %v428, %v427
    %v464 = vpack.c.b16 %v430, %v429
    %v465 = vpack.c.b16 %v432, %v431
    %v466 = vpack.c.b16 %v434, %v433
    %499 = vmatprep.subr.bf16.mxu0 0
    %500 = vmatpush1.bf16.msra.mxu0 %v435
    %501 = vmatprep.subr.bf16.mxu0 0
    %502 = vmatpush1.bf16.msra.mxu0 %v436
    %503 = vmatprep.subr.bf16.mxu0 0
    %504 = vmatpush1.bf16.msra.mxu0 %v437
    %505 = vmatprep.subr.bf16.mxu0 0
    %506 = vmatpush1.bf16.msra.mxu0 %v438
    %507 = vmatprep.subr.bf16.mxu0 0
    %508 = vmatpush1.bf16.msra.mxu0 %v439
    %509 = vmatprep.subr.bf16.mxu0 0
    %510 = vmatpush1.bf16.msra.mxu0 %v440
    %511 = vmatprep.subr.bf16.mxu0 0
    %512 = vmatpush1.bf16.msra.mxu0 %v441
    %513 = vmatprep.subr.bf16.mxu0 0
    %514 = vmatpush1.bf16.msra.mxu0 %v442
    %515 = vmatprep.subr.bf16.mxu0 0
    %516 = vmatpush1.bf16.msra.mxu0 %v443
    %517 = vmatprep.subr.bf16.mxu0 0
    %518 = vmatpush1.bf16.msra.mxu0 %v444
    %519 = vmatprep.subr.bf16.mxu0 0
    %520 = vmatpush1.bf16.msra.mxu0 %v445
    %521 = vmatprep.subr.bf16.mxu0 0
    %522 = vmatpush1.bf16.msra.mxu0 %v446
    %523 = vmatprep.subr.bf16.mxu0 0
    %524 = vmatpush1.bf16.msra.mxu0 %v447
    %525 = vmatprep.subr.bf16.mxu0 0
    %526 = vmatpush1.bf16.msra.mxu0 %v448
    %527 = vmatprep.subr.bf16.mxu0 0
    %528 = vmatpush1.bf16.msra.mxu0 %v449
    %529 = vmatprep.subr.bf16.mxu0 0
    %530 = vmatpush1.bf16.msra.mxu0 %v450
    %531 = vmatprep.mubr.bf16.mxu0 %v244
    %532 = vmatmul.mubr.bf16.gmra.mrb[0].mxu0 %v243
    %v533 = vpop.f32.mrb[0].mxu0
    %v534 = vadd.f32 %v145, %v533
    %v535 = vpop.f32.mrb[0].mxu0
    %v536 = vpop.f32.mrb[0].mxu0
    %v537 = vadd.f32 %v145, %v536
    %v538 = vpop.f32.mrb[0].mxu0
    %539 = vmatprep.mubr.bf16.mxu0 %v248
    %540 = vmatmul.mubr.bf16.gmra.mrb[0].mxu0 %v247
    %v541 = vpop.f32.mrb[0].mxu0
    %v542 = vadd.f32 %v145, %v541
    %v543 = vpop.f32.mrb[0].mxu0
    %v544 = vpop.f32.mrb[0].mxu0
    %v545 = vadd.f32 %v145, %v544
    %v546 = vpop.f32.mrb[0].mxu0
    %547 = vmatprep.mubr.bf16.mxu0 %v252
    %548 = vmatmul.mubr.bf16.gmra.mrb[0].mxu0 %v251
    %v549 = vpop.f32.mrb[0].mxu0
    %v550 = vadd.f32 %v145, %v549
    %v551 = vpop.f32.mrb[0].mxu0
    %v552 = vpop.f32.mrb[0].mxu0
    %v553 = vadd.f32 %v145, %v552
    %v554 = vpop.f32.mrb[0].mxu0
    %555 = vmatprep.mubr.bf16.mxu0 %v256
    %556 = vmatmul.mubr.bf16.gmra.mrb[0].mxu0 %v255
    %v557 = vpop.f32.mrb[0].mxu0
    %v558 = vadd.f32 %v145, %v557
    %v559 = vpop.f32.mrb[0].mxu0
    %v560 = vpop.f32.mrb[0].mxu0
    %v561 = vadd.f32 %v145, %v560
    %v562 = vpop.f32.mrb[0].mxu0
    %563 = vmatprep.mubr.bf16.mxu0 %v260
    %564 = vmatmul.mubr.bf16.gmra.mrb[0].mxu0 %v259
    %v565 = vpop.f32.mrb[0].mxu0
    %v566 = vadd.f32 %v145, %v565
    %v567 = vpop.f32.mrb[0].mxu0
    %v568 = vpop.f32.mrb[0].mxu0
    %v569 = vadd.f32 %v145, %v568
    %v570 = vpop.f32.mrb[0].mxu0
    %571 = vmatprep.mubr.bf16.mxu0 %v264
    %572 = vmatmul.mubr.bf16.gmra.mrb[0].mxu0 %v263
    %v573 = vpop.f32.mrb[0].mxu0
    %v574 = vadd.f32 %v145, %v573
    %v575 = vpop.f32.mrb[0].mxu0
    %v576 = vpop.f32.mrb[0].mxu0
    %v577 = vadd.f32 %v145, %v576
    %v578 = vpop.f32.mrb[0].mxu0
    %579 = vmatprep.mubr.bf16.mxu0 %v268
    %580 = vmatmul.mubr.bf16.gmra.mrb[0].mxu0 %v267
    %v581 = vpop.f32.mrb[0].mxu0
    %v582 = vadd.f32 %v145, %v581
    %v583 = vpop.f32.mrb[0].mxu0
    %v584 = vpop.f32.mrb[0].mxu0
    %v585 = vadd.f32 %v145, %v584
    %v586 = vpop.f32.mrb[0].mxu0
    %587 = vmatprep.mubr.bf16.mxu0 %v272
    %588 = vmatmul.mubr.bf16.gmra.mrb[0].mxu0 %v271
    %v589 = vpop.f32.mrb[0].mxu0
    %v590 = vadd.f32 %v145, %v589
    %v591 = vpop.f32.mrb[0].mxu0
    %v592 = vpop.f32.mrb[0].mxu0
    %v593 = vadd.f32 %v145, %v592
    %v594 = vpop.f32.mrb[0].mxu0
    %595 = vdwg.mxu0
    %596 = vmatprep.subr.bf16.mxu0 0
    %597 = vmatpush1.bf16.msra.mxu0 %v451
    %598 = vmatprep.subr.bf16.mxu0 0
    %599 = vmatpush1.bf16.msra.mxu0 %v452
    %600 = vmatprep.subr.bf16.mxu0 0
    %601 = vmatpush1.bf16.msra.mxu0 %v453
    %602 = vmatprep.subr.bf16.mxu0 0
    %603 = vmatpush1.bf16.msra.mxu0 %v454
    %604 = vmatprep.subr.bf16.mxu0 0
    %605 = vmatpush1.bf16.msra.mxu0 %v455
    %606 = vmatprep.subr.bf16.mxu0 0
    %607 = vmatpush1.bf16.msra.mxu0 %v456
    %608 = vmatprep.subr.bf16.mxu0 0
    %609 = vmatpush1.bf16.msra.mxu0 %v457
    %610 = vmatprep.subr.bf16.mxu0 0
    %611 = vmatpush1.bf16.msra.mxu0 %v458
    %612 = vmatprep.subr.bf16.mxu0 0
    %613 = vmatpush1.bf16.msra.mxu0 %v459
    %614 = vmatprep.subr.bf16.mxu0 0
    %615 = vmatpush1.bf16.msra.mxu0 %v460
    %616 = vmatprep.subr.bf16.mxu0 0
    %617 = vmatpush1.bf16.msra.mxu0 %v461
    %618 = vmatprep.subr.bf16.mxu0 0
    %619 = vmatpush1.bf16.msra.mxu0 %v462
    %620 = vmatprep.subr.bf16.mxu0 0
    %621 = vmatpush1.bf16.msra.mxu0 %v463
    %622 = vmatprep.subr.bf16.mxu0 0
    %623 = vmatpush1.bf16.msra.mxu0 %v464
    %624 = vmatprep.subr.bf16.mxu0 0
    %625 = vmatpush1.bf16.msra.mxu0 %v465
    %626 = vmatprep.subr.bf16.mxu0 0
    %627 = vmatpush1.bf16.msra.mxu0 %v466
    %628 = vmatprep.mubr.bf16.mxu0 %v246
    %629 = vmatmul.mubr.bf16.gmra.mrb[0].mxu0 %v245
    %v630 = vpop.f32.mrb[0].mxu0
    %v631 = vadd.f32 %v534, %v630
    %v632 = vpop.f32.mrb[0].mxu0
    %v633 = vpop.f32.mrb[0].mxu0
    %v634 = vadd.f32 %v537, %v633
    %v635 = vpop.f32.mrb[0].mxu0
    %636 = vmatprep.mubr.bf16.mxu0 %v250
    %637 = vmatmul.mubr.bf16.gmra.mrb[0].mxu0 %v249
    %v638 = vpop.f32.mrb[0].mxu0
    %v639 = vadd.f32 %v542, %v638
    %v640 = vpop.f32.mrb[0].mxu0
    %v641 = vpop.f32.mrb[0].mxu0
    %v642 = vadd.f32 %v545, %v641
    %v643 = vpop.f32.mrb[0].mxu0
    %644 = vmatprep.mubr.bf16.mxu0 %v254
    %645 = vmatmul.mubr.bf16.gmra.mrb[0].mxu0 %v253
    %v646 = vpop.f32.mrb[0].mxu0
    %v647 = vadd.f32 %v550, %v646
    %v648 = vpop.f32.mrb[0].mxu0
    %v649 = vpop.f32.mrb[0].mxu0
    %v650 = vadd.f32 %v553, %v649
    %v651 = vpop.f32.mrb[0].mxu0
    %652 = vmatprep.mubr.bf16.mxu0 %v258
    %653 = vmatmul.mubr.bf16.gmra.mrb[0].mxu0 %v257
    %v654 = vpop.f32.mrb[0].mxu0
    %v655 = vadd.f32 %v558, %v654
    %v656 = vpop.f32.mrb[0].mxu0
    %v657 = vpop.f32.mrb[0].mxu0
    %v658 = vadd.f32 %v561, %v657
    %v659 = vpop.f32.mrb[0].mxu0
    %660 = vmatprep.mubr.bf16.mxu0 %v262
    %661 = vmatmul.mubr.bf16.gmra.mrb[0].mxu0 %v261
    %v662 = vpop.f32.mrb[0].mxu0
    %v663 = vadd.f32 %v566, %v662
    %v664 = vpop.f32.mrb[0].mxu0
    %v665 = vpop.f32.mrb[0].mxu0
    %v666 = vadd.f32 %v569, %v665
    %v667 = vpop.f32.mrb[0].mxu0
    %668 = vmatprep.mubr.bf16.mxu0 %v266
    %669 = vmatmul.mubr.bf16.gmra.mrb[0].mxu0 %v265
    %v670 = vpop.f32.mrb[0].mxu0
    %v671 = vadd.f32 %v574, %v670
    %v672 = vpop.f32.mrb[0].mxu0
    %v673 = vpop.f32.mrb[0].mxu0
    %v674 = vadd.f32 %v577, %v673
    %v675 = vpop.f32.mrb[0].mxu0
    %676 = vmatprep.mubr.bf16.mxu0 %v270
    %677 = vmatmul.mubr.bf16.gmra.mrb[0].mxu0 %v269
    %v678 = vpop.f32.mrb[0].mxu0
    %v679 = vadd.f32 %v582, %v678
    %v680 = vpop.f32.mrb[0].mxu0
    %v681 = vpop.f32.mrb[0].mxu0
    %v682 = vadd.f32 %v585, %v681
    %v683 = vpop.f32.mrb[0].mxu0
    %684 = vmatprep.mubr.bf16.mxu0 %v274
    %685 = vmatmul.mubr.bf16.gmra.mrb[0].mxu0 %v273
    %v686 = vpop.f32.mrb[0].mxu0
    %v687 = vadd.f32 %v590, %v686
    %v688 = vpop.f32.mrb[0].mxu0
    %v689 = vpop.f32.mrb[0].mxu0
    %v690 = vadd.f32 %v593, %v689
    %v691 = vpop.f32.mrb[0].mxu0
    %692 = vdwg.mxu0
    %v693 = vmax.f32 %v631, 0.0
    %v694 = vmax.f32 %v634, 0.0
    %v695 = vmax.f32 %v639, 0.0
    %v696 = vmax.f32 %v642, 0.0
    %v697 = vmax.f32 %v647, 0.0
    %v698 = vmax.f32 %v650, 0.0
    %v699 = vmax.f32 %v655, 0.0
    %v700 = vmax.f32 %v658, 0.0
    %v701 = vmax.f32 %v663, 0.0
    %v702 = vmax.f32 %v666, 0.0
    %v703 = vmax.f32 %v671, 0.0
    %v704 = vmax.f32 %v674, 0.0
    %v705 = vmax.f32 %v679, 0.0
    %v706 = vmax.f32 %v682, 0.0
    %v707 = vmax.f32 %v687, 0.0
    %v708 = vmax.f32 %v690, 0.0
    %v709 = vmin.f32 %v693, 20.0
    %v710 = vmin.f32 %v694, 20.0
    %v711 = vmin.f32 %v695, 20.0
    %v712 = vmin.f32 %v696, 20.0
    %v713 = vmin.f32 %v697, 20.0
    %v714 = vmin.f32 %v698, 20.0
    %v715 = vmin.f32 %v699, 20.0
    %v716 = vmin.f32 %v700, 20.0
    %v717 = vmin.f32 %v701, 20.0
    %v718 = vmin.f32 %v702, 20.0
    %v719 = vmin.f32 %v703, 20.0
    %v720 = vmin.f32 %v704, 20.0
    %v721 = vmin.f32 %v705, 20.0
    %v722 = vmin.f32 %v706, 20.0
    %v723 = vmin.f32 %v707, 20.0
    %v724 = vmin.f32 %v708, 20.0
    %725 = vst [vmem:[#allocation7] sm:$0xff] %v709
    %726 = vst [vmem:[#allocation7 + $0x8] sm:$0xff] %v710
    %727 = vst [vmem:[#allocation7 + $0x10] sm:$0xff] %v711
    %728 = vst [vmem:[#allocation7 + $0x18] sm:$0xff] %v712
    %729 = vst [vmem:[#allocation7 + $0x20] sm:$0xff] %v713
    %730 = vst [vmem:[#allocation7 + $0x28] sm:$0xff] %v714
    %731 = vst [vmem:[#allocation7 + $0x30] sm:$0xff] %v715
    %732 = vst [vmem:[#allocation7 + $0x38] sm:$0xff] %v716
    %733 = vst [vmem:[#allocation7 + $0x40] sm:$0xff] %v717
    %734 = vst [vmem:[#allocation7 + $0x48] sm:$0xff] %v718
    %735 = vst [vmem:[#allocation7 + $0x50] sm:$0xff] %v719
    %736 = vst [vmem:[#allocation7 + $0x58] sm:$0xff] %v720
    %737 = vst [vmem:[#allocation7 + $0x60] sm:$0xff] %v721
    %738 = vst [vmem:[#allocation7 + $0x68] sm:$0xff] %v722
    %739 = vst [vmem:[#allocation7 + $0x70] sm:$0xff] %v723
    %740 = vst [vmem:[#allocation7 + $0x78] sm:$0xff] %v724
    // Predicated region
    $region22: #{tpu_custom_call.1} parent=1 // pred_check
      _
    $region23: #{tpu_custom_call.1} parent=1 // pred_check_branch
      %742 = sbr.rel (0) target = $region25
    $region24: #{tpu_custom_call.1} parent=1 // pred_region
      %s744 = ssub.s32 2048, 2048
      %745 = vsyncadd [#allocation4], %s744
      %s746 = sshll.u32 [#allocation7], 4
      %s747 = int_to_ptr.vmem [resolvable:$true] %s746
      %752 = dma.vmem_to_hbm [thread:$0]  %s747, 2048, %s3, [#allocation4], 128, 128, 8
    $region25: #{tpu_custom_call.1} parent=1 // pred_fallthru
      _
    // Predicated region
    $region26: #{tpu_custom_call.1} parent=1 // pred_check
      _
    $region27: #{tpu_custom_call.1} parent=1 // pred_check_branch
      %754 = sbr.rel (0) target = $region29
    $region28: #{tpu_custom_call.1} parent=1 // pred_region
      %755 = dma.done [#allocation4], 2048
    $region29: #{tpu_custom_call.1} parent=1 // pred_fallthru
      _
    %756 = vsyncpa [#allocation3], 1
    %757 = vsyncpa [#allocation6], 1
    %758 = vsyncpa [#allocation4], 1

</llo_original>
